<compile_context>
chip_gen: v7x
topology: tpu7x:2x2x1
jax: 0.10.0
libtpu: 0.0.40
codegen_flags: <defaults>
</compile_context>

<pallas_src>
import functools

import jax
import jax.numpy as jnp
from jax.experimental import pallas as pl
from jax.experimental.pallas import tpu as pltpu

DILATION = 1.0  # PartAssociationFields.dilation


def _round_up(x, m):
    return ((x + m - 1) // m) * m


def _paf_kernel(x_ref, w_ref, b_ref, class_ref, reg1_ref, reg2_ref):
    """Fused 1x1-conv PAF head, spatial axis on lanes.

    x_ref:     (1, Cin, tn)       input tile (N, C, HW layout; lane = spatial)
    w_ref:     (5*Cout, Cin)      fused weights, rows = [reg1 | reg2 | class]
    b_ref:     (5*Cout, 1)        fused bias
    class_ref: (1, Cout,   tn)    sigmoid(class conv)
    reg1_ref:  (1, 2*Cout, tn)    reg1 conv (* dilation)
    reg2_ref:  (1, 2*Cout, tn)    reg2 conv (* dilation)
    """
    x = x_ref[0]                                            # (Cin, tn)
    # One fused MXU push for all three heads, f32 accumulate, lane-dense N.
    y = jnp.dot(w_ref[...], x, preferred_element_type=jnp.float32) + b_ref[...]

    c = class_ref.shape[1]                                  # Cout
    reg1 = y[0:2 * c]
    reg2 = y[2 * c:4 * c]
    cls = y[4 * c:5 * c]
    if DILATION != 1.0:                                     # trace-time no-op at default
        reg1 = reg1 * DILATION
        reg2 = reg2 * DILATION
    reg1_ref[0] = reg1
    reg2_ref[0] = reg2
    class_ref[0] = jax.nn.sigmoid(cls)


@functools.partial(jax.jit, static_argnames=("tn_max",))
def part_association_fields_forward(x_nchw, wc, bc, w1, b1, w2, b2, *,
                                    tn_max=16384):
    """Forward of PartAssociationFields (quad=0, predict_spread=False, dropout_p=0).

    Args:
      x_nchw: (B, Cin, H, W) float32 input (PyTorch NCHW convention).
      wc, bc: class_conv weight (Cout, Cin) [torch layout] and bias (Cout,).
      w1, b1: reg1_conv weight (2*Cout, Cin) and bias (2*Cout,).
      w2, b2: reg2_conv weight (2*Cout, Cin) and bias (2*Cout,).
      tn_max: upper bound on the lane (spatial) tile size; defensively rounded
        down to a multiple of 128.

    Returns:
      [class_x (B, Cout, H, W), reg1_x (B, Cout, 2, H, W), reg2_x (B, Cout, 2, H, W)]
    """
    B, Cin, H, W = x_nchw.shape
    Cout = wc.shape[0]
    C2 = w1.shape[0]                  # 2*Cout
    Ct = Cout + 2 * C2                # 5*Cout fused output channels

    HW = H * W

    # Lane tile: multiple of 128 (fills the MXU lanes and keeps stores
    # unmasked on whole blocks), as large as possible up to tn_max so the
    # per-grid-step overhead is amortized.  No HBM-side padding: Pallas masks
    # the (possibly partial) last lane block, and the ops are elementwise so
    # garbage OOB lanes never contaminate valid output lanes.
    tn_max = max(128, (int(tn_max) // 128) * 128)           # defensive 128-multiple
    tn = min(_round_up(HW, 128), tn_max)
    nblk = pl.cdiv(HW, tn)
    if B == 1 and nblk == 1 and HW > 128:
        # Keep >= 2 grid steps along a "parallel" axis so v7x's two
        # TensorCores both get work when there is only one batch element.
        tn = _round_up(-(-HW // 2), 128)
        nblk = pl.cdiv(HW, tn)

    # NCHW -> (B, Cin, HW): metadata-only reshape, no transpose / extra HBM pass.
    x_flat = x_nchw.reshape(B, Cin, HW)

    # Fuse the three 1x1-conv heads into one (5*Cout, Cin) weight + bias.
    # Row order [reg1 | reg2 | class] keeps the in-kernel row slices aligned
    # to 8-sublane boundaries for the common Cout = 4 case.
    w_fused = jnp.concatenate([w1, w2, wc], axis=0)                 # (Ct, Cin)
    b_fused = jnp.concatenate([b1, b2, bc], axis=0).reshape(Ct, 1)  # (Ct, 1)

    grid = (B, nblk)

    cost = pl.CostEstimate(
        flops=2 * B * HW * Cin * Ct,
        transcendentals=B * HW * Cout,
        bytes_accessed=4 * (B * HW * (Cin + Ct) + Ct * (Cin + 1)),
    )

    class_f, reg1_f, reg2_f = pl.pallas_call(
        _paf_kernel,
        out_shape=(
            jax.ShapeDtypeStruct((B, Cout, HW), jnp.float32),
            jax.ShapeDtypeStruct((B, C2, HW), jnp.float32),
            jax.ShapeDtypeStruct((B, C2, HW), jnp.float32),
        ),
        grid_spec=pltpu.PrefetchScalarGridSpec(
            num_scalar_prefetch=0,
            grid=grid,
            in_specs=[
                pl.BlockSpec((1, Cin, tn), lambda b, j: (b, 0, j)),   # x tile
                pl.BlockSpec((Ct, Cin), lambda b, j: (0, 0)),         # fused weight
                pl.BlockSpec((Ct, 1), lambda b, j: (0, 0)),           # fused bias
            ],
            out_specs=[
                pl.BlockSpec((1, Cout, tn), lambda b, j: (b, 0, j)),
                pl.BlockSpec((1, C2, tn), lambda b, j: (b, 0, j)),
                pl.BlockSpec((1, C2, tn), lambda b, j: (b, 0, j)),
            ],
        ),
        compiler_params=pltpu.CompilerParams(
            dimension_semantics=("parallel", "parallel")),
        cost_estimate=cost,
    )(x_flat, w_fused, b_fused)

    # Outputs already come out in NCHW channel order: metadata reshapes only.
    class_x = class_f.reshape(B, Cout, H, W)
    reg1_x = reg1_f.reshape(B, C2 // 2, 2, H, W)   # matches torch reshape(B, C, 2, H, W)
    reg2_x = reg2_f.reshape(B, C2 // 2, 2, H, W)

    # TODO(synk): quad>0 dequad interleave and predict_spread (conv + clamp(-3,5))
    # branches not implemented (default config quad=0, predict_spread=False);
    # Dropout2d(p=0.0) is identity.  bf16 outputs would ~halve HBM write
    # traffic but are left off to match torch float32 numerics.
    return [class_x, reg1_x, reg2_x]


if __name__ == "__main__":
    # Module config (defaults): quad=0, predict_spread=False, dropout_p=0.0
    n_associations = 4
    in_features = 4
    B, H, W = 2, 16, 16
    Cout = n_associations * (4 ** 0)      # quad=0

    key = jax.random.PRNGKey(0)
    kx, kwc, kbc, kw1, kb1, kw2, kb2 = jax.random.split(key, 7)

    x = jax.random.normal(kx, (B, in_features, H, W), dtype=jnp.float32)

    # torch-native 1x1-conv weight layout: (Cout, Cin)
    wc = 0.05 * jax.random.normal(kwc, (Cout, in_features), dtype=jnp.float32)
    bc = 0.05 * jax.random.normal(kbc, (Cout,), dtype=jnp.float32)
    # reg1_conv / reg2_conv: torch.nn.init.normal_(std=0.01)
    w1 = 0.01 * jax.random.normal(kw1, (2 * Cout, in_features), dtype=jnp.float32)
    b1 = 0.01 * jax.random.normal(kb1, (2 * Cout,), dtype=jnp.float32)
    w2 = 0.01 * jax.random.normal(kw2, (2 * Cout, in_features), dtype=jnp.float32)
    b2 = 0.01 * jax.random.normal(kb2, (2 * Cout,), dtype=jnp.float32)

    outs = part_association_fields_forward(x, wc, bc, w1, b1, w2, b2)
    outs = [jax.block_until_ready(o) for o in outs]

    # Pure-JAX reference of the same math (NCHW throughout).
    def conv1x1(w, b):
        return jnp.einsum("oi,bihw->bohw", w, x,
                          precision=jax.lax.Precision.HIGHEST) + b[None, :, None, None]

    ref_class = jax.nn.sigmoid(conv1x1(wc, bc))
    ref_reg1 = (conv1x1(w1, b1) * DILATION).reshape(B, Cout, 2, H, W)
    ref_reg2 = (conv1x1(w2, b2) * DILATION).reshape(B, Cout, 2, H, W)

    assert outs[0].shape == (B, Cout, H, W)
    assert outs[1].shape == (B, Cout, 2, H, W)
    assert outs[2].shape == (B, Cout, 2, H, W)
    assert jnp.allclose(outs[0], ref_class, atol=1e-5), "class mismatch"
    assert jnp.allclose(outs[1], ref_reg1, atol=1e-5), "reg1 mismatch"
    assert jnp.allclose(outs[2], ref_reg2, atol=1e-5), "reg2 mismatch"

    # Also exercise a non-128-divisible spatial size (partial last lane block,
    # no HBM-side padding or post-kernel slicing).
    H2, W2 = 17, 19
    x2 = jax.random.normal(kx, (1, in_features, H2, W2), dtype=jnp.float32)
    outs2 = part_association_fields_forward(x2, wc, bc, w1, b1, w2, b2)
    outs2 = [jax.block_until_ready(o) for o in outs2]

    def conv1x1_2(w, b):
        return jnp.einsum("oi,bihw->bohw", w, x2,
                          precision=jax.lax.Precision.HIGHEST) + b[None, :, None, None]

    ref2_class = jax.nn.sigmoid(conv1x1_2(wc, bc))
    ref2_reg1 = (conv1x1_2(w1, b1) * DILATION).reshape(1, Cout, 2, H2, W2)
    ref2_reg2 = (conv1x1_2(w2, b2) * DILATION).reshape(1, Cout, 2, H2, W2)
    assert jnp.allclose(outs2[0], ref2_class, atol=1e-5), "class mismatch (ragged)"
    assert jnp.allclose(outs2[1], ref2_reg1, atol=1e-5), "reg1 mismatch (ragged)"
    assert jnp.allclose(outs2[2], ref2_reg2, atol=1e-5), "reg2 mismatch (ragged)"

    print("KERNEL_OK")
</pallas_src>

<mosaic_0001>
module attributes {stable_mosaic.version = 11 : i64} {
  func.func @_paf_kernel(%arg0: i32, %arg1: i32, %arg2: memref<1x4x256xf32, #tpu.memory_space<vmem>>, %arg3: memref<20x4xf32, #tpu.memory_space<vmem>>, %arg4: memref<20x1xf32, #tpu.memory_space<vmem>>, %arg5: memref<1x4x256xf32, #tpu.memory_space<vmem>>, %arg6: memref<1x8x256xf32, #tpu.memory_space<vmem>>, %arg7: memref<1x8x256xf32, #tpu.memory_space<vmem>>) attributes {dimension_semantics = [#tpu.dimension_semantics<parallel>, #tpu.dimension_semantics<parallel>], iteration_bounds = array<i64: 2, 1>, scalar_prefetch = 0 : i64, scratch_operands = 0 : i64, tpu.core_type = #tpu.core_type<tc>, window_params = [{transform_indices = @transform_0, window_bounds = array<i64: 1, 4, 256>}, {pipeline_mode = #tpu.pipeline_mode<synchronous>, transform_indices = @transform_1, window_bounds = array<i64: 20, 4>}, {pipeline_mode = #tpu.pipeline_mode<synchronous>, transform_indices = @transform_2, window_bounds = array<i64: 20, 1>}, {transform_indices = @transform_3, window_bounds = array<i64: 1, 4, 256>}, {transform_indices = @transform_4, window_bounds = array<i64: 1, 8, 256>}, {transform_indices = @transform_5, window_bounds = array<i64: 1, 8, 256>}]} {
    %c0 = arith.constant 0 : index
    %c0_0 = arith.constant 0 : index
    %c0_1 = arith.constant 0 : index
    %0 = vector.load %arg2[%c0, %c0_0, %c0_1] : memref<1x4x256xf32, #tpu.memory_space<vmem>>, vector<1x4x256xf32>
    %1 = vector.shape_cast %0 : vector<1x4x256xf32> to vector<4x256xf32>
    %c0_2 = arith.constant 0 : index
    %c0_3 = arith.constant 0 : index
    %2 = vector.load %arg3[%c0_2, %c0_3] : memref<20x4xf32, #tpu.memory_space<vmem>>, vector<20x4xf32>
    %cst = arith.constant dense<0.000000e+00> : vector<20x256xf32>
    %3 = tpu.matmul %2, %1, %cst {dimension_numbers = #tpu.dot_dimension_numbers<[1], [0], [0], [1], [0, 0, 1, 1], [], []>} : vector<20x4xf32>, vector<4x256xf32>, vector<20x256xf32> -> vector<20x256xf32>
    %c0_4 = arith.constant 0 : index
    %c0_5 = arith.constant 0 : index
    %4 = vector.load %arg4[%c0_4, %c0_5] : memref<20x1xf32, #tpu.memory_space<vmem>>, vector<20x1xf32>
    %5 = vector.broadcast %4 : vector<20x1xf32> to vector<20x256xf32>
    %6 = arith.addf %3, %5 : vector<20x256xf32>
    %7 = vector.extract_strided_slice %6 {offsets = [0, 0], sizes = [8, 256], strides = [1, 1]} : vector<20x256xf32> to vector<8x256xf32>
    %8 = vector.extract_strided_slice %6 {offsets = [8, 0], sizes = [8, 256], strides = [1, 1]} : vector<20x256xf32> to vector<8x256xf32>
    %9 = vector.extract_strided_slice %6 {offsets = [16, 0], sizes = [4, 256], strides = [1, 1]} : vector<20x256xf32> to vector<4x256xf32>
    %c0_6 = arith.constant 0 : index
    %c0_7 = arith.constant 0 : index
    %c0_8 = arith.constant 0 : index
    %10 = vector.load %arg6[%c0_6, %c0_7, %c0_8] : memref<1x8x256xf32, #tpu.memory_space<vmem>>, vector<1x8x256xf32>
    %11 = vector.shape_cast %10 : vector<1x8x256xf32> to vector<8x256xf32>
    %12 = vector.shape_cast %7 : vector<8x256xf32> to vector<1x8x256xf32>
    tpu.vector_store %arg6[%c0_6, %c0_7, %c0_8], %12 {strides = array<i32>} : memref<1x8x256xf32, #tpu.memory_space<vmem>>, vector<1x8x256xf32>,
    %c0_9 = arith.constant 0 : index
    %c0_10 = arith.constant 0 : index
    %c0_11 = arith.constant 0 : index
    %13 = vector.load %arg7[%c0_9, %c0_10, %c0_11] : memref<1x8x256xf32, #tpu.memory_space<vmem>>, vector<1x8x256xf32>
    %14 = vector.shape_cast %13 : vector<1x8x256xf32> to vector<8x256xf32>
    %15 = vector.shape_cast %8 : vector<8x256xf32> to vector<1x8x256xf32>
    tpu.vector_store %arg7[%c0_9, %c0_10, %c0_11], %15 {strides = array<i32>} : memref<1x8x256xf32, #tpu.memory_space<vmem>>, vector<1x8x256xf32>,
    %16 = arith.negf %9 : vector<4x256xf32>
    %17 = math.exp %16 : vector<4x256xf32>
    %cst_12 = arith.constant 1.000000e+00 : f32
    %18 = vector.broadcast %cst_12 : f32 to vector<4x256xf32>
    %19 = arith.addf %18, %17 : vector<4x256xf32>
    %20 = arith.divf %18, %19 : vector<4x256xf32>
    %c0_13 = arith.constant 0 : index
    %c0_14 = arith.constant 0 : index
    %c0_15 = arith.constant 0 : index
    %21 = vector.load %arg5[%c0_13, %c0_14, %c0_15] : memref<1x4x256xf32, #tpu.memory_space<vmem>>, vector<1x4x256xf32>
    %22 = vector.shape_cast %21 : vector<1x4x256xf32> to vector<4x256xf32>
    %23 = vector.shape_cast %20 : vector<4x256xf32> to vector<1x4x256xf32>
    tpu.vector_store %arg5[%c0_13, %c0_14, %c0_15], %23 {strides = array<i32>} : memref<1x4x256xf32, #tpu.memory_space<vmem>>, vector<1x4x256xf32>,
    return
  }
  func.func @transform_0(%arg0: i32, %arg1: i32) -> (i32, i32, i32) {
    %c0_i32 = arith.constant 0 : i32
    %c0_i32_0 = arith.constant 0 : i32
    return %arg0, %c0_i32, %arg1 : i32, i32, i32
  }
  func.func @transform_1(%arg0: i32, %arg1: i32) -> (i32, i32) {
    %c0_i32 = arith.constant 0 : i32
    %c0_i32_0 = arith.constant 0 : i32
    %c0_i32_1 = arith.constant 0 : i32
    return %c0_i32, %c0_i32_0 : i32, i32
  }
  func.func @transform_2(%arg0: i32, %arg1: i32) -> (i32, i32) {
    %c0_i32 = arith.constant 0 : i32
    %c0_i32_0 = arith.constant 0 : i32
    %c0_i32_1 = arith.constant 0 : i32
    return %c0_i32, %c0_i32_0 : i32, i32
  }
  func.func @transform_3(%arg0: i32, %arg1: i32) -> (i32, i32, i32) {
    %c0_i32 = arith.constant 0 : i32
    %c0_i32_0 = arith.constant 0 : i32
    return %arg0, %c0_i32, %arg1 : i32, i32, i32
  }
  func.func @transform_4(%arg0: i32, %arg1: i32) -> (i32, i32, i32) {
    %c0_i32 = arith.constant 0 : i32
    %c0_i32_0 = arith.constant 0 : i32
    return %arg0, %c0_i32, %arg1 : i32, i32, i32
  }
  func.func @transform_5(%arg0: i32, %arg1: i32) -> (i32, i32, i32) {
    %c0_i32 = arith.constant 0 : i32
    %c0_i32_0 = arith.constant 0 : i32
    return %arg0, %c0_i32, %arg1 : i32, i32, i32
  }
}

</mosaic_0001>

<llo_original>
// kernel: part_association_fields_forward.1
$region0: #{part_association_fields_forward.1}
  #allocation0 [shape = 'u32[]', space=smem, size = 0x4, offset = 0x4, fixed_abs, tag = 'smem constant byte address 0x4 - core index']
  #allocation1 [shape = 'u32[144,128]{1,0:T(1,128)}', space=vmem, size = 0x12000, scoped, tag = 'internal scratch']
  %s0 = inlined_call_operand.vmem [shape: f32[2,4,256], index: 0, kind: input, shape index: {}]
  %s1 = inlined_call_operand.vmem [shape: f32[20,4], index: 1, kind: input, shape index: {}]
  %s2 = inlined_call_operand.vmem [shape: f32[20,1], index: 2, kind: input, shape index: {}]
  %s3 = inlined_call_operand.vmem [shape: f32[2,4,256], index: 3, kind: output, shape index: {0}]
  %s4 = inlined_call_operand.vmem [shape: f32[2,8,256], index: 4, kind: output, shape index: {1}]
  %s5 = inlined_call_operand.vmem [shape: f32[2,8,256], index: 5, kind: output, shape index: {2}]
  %6 = xla_tuple %s3, %s4, %s5
  %s7 = sld [smem:[#allocation0]]
  $region61: #{part_association_fields_forward.1} parent=0
    _
  %s9 = ssub.s32 1, %s7
  %s10 = scalar_select 0, %s9, %s7
  loop: start=0, step=1, limit=4
  $region2: #{part_association_fields_forward.1} parent=0 // loop_pre_header
    _
  $region3: #{part_association_fields_forward.1} parent=0 // loop_header
    %s12 = sphi 0, %s16
    %p13 = scmp.ge.s32.totalorder %s12, 4
    %s19 = sphi 0, %s31
    %s20 = sphi 0, %s27
    %s21 = sphi 0, %s19
    %s22 = sphi 0, %s20
    %s23 = sphi 0, %s21
    %s24 = sphi 0, %s22
    %s36 = sphi 0, %s38
    %s39 = sphi 0, %s36
    %s40 = sphi 0, %s39
    %s56 = sphi 0, %s40
    %s60 = sphi 0, %s60
    %s62 = sphi 0, %s60
    %s63 = sphi 0, %s62
    %s77 = sphi 0, %s63
    %s81 = sphi 0, %s81
    %s83 = sphi 0, %s81
    %s84 = sphi 0, %s83
    %s98 = sphi 0, %s84
    %s106 = sphi 0, %s108
    %s109 = sphi 0, %s106
    %s110 = sphi 0, %s109
    %s126 = sphi 0, %s110
    %s134 = sphi 0, %s136
    %s137 = sphi 0, %s134
    %s138 = sphi 0, %s137
    %s154 = sphi 0, %s138
    %s162 = sphi 0, %s164
    %s165 = sphi 0, %s162
    %s166 = sphi 0, %s165
    %s182 = sphi 0, %s166
  $region4: #{part_association_fields_forward.1} parent=0 // loop_header_branch
    %15 = sbr.rel (%p13) target = $region8
  $region5: #{part_association_fields_forward.1} parent=0 // loop_body
    %s17 = ssub.s32 %s12, 1
    %s18 = ssub.s32 %s12, 2
    %s25 = sadd.s32 1, %s20
    %p26 = scmp.ge.s32.totalorder %s25, 1
    %s27 = scalar_select %p26, 0, %s25
    %s28 = sadd.s32 1, %s19
    %s29 = scalar_select %p26, %s28, %s19
    %p30 = scmp.ge.s32.totalorder %s29, 2
    %s31 = scalar_select %p30, 0, %s29
    %s32 = ssub.s32 %s19, %s31
    %s33 = ssub.s32 %s20, %s27
    %s34 = sor.u32 %s32, %s33
    %p35 = scmp.eq.s32.totalorder %s34, 0
    %s37 = sadd.s32 %s36, 1
    %s38 = scalar_select %p35, %s36, %s37
    %p41 = pneg %p35
    %p42 = scmp.eq.s32.totalorder %s12, 1
    %p43 = por %p41, %p42
    %p44 = scmp.ne.s32.totalorder %s36, %s39
    %p45 = scmp.eq.s32.totalorder %s12, 0
    %p46 = por %p44, %p45
    %p47 = scmp.ne.s32.totalorder %s36, %s39
    %p48 = scmp.eq.s32.totalorder %s17, 1
    %p49 = por %p47, %p48
    %p50 = scmp.ne.s32.totalorder %s39, %s40
    %p51 = scmp.eq.s32.totalorder %s17, 0
    %p52 = por %p50, %p51
    %p53 = scmp.ne.s32.totalorder %s39, %s40
    %p54 = scmp.eq.s32.totalorder %s18, 1
    %p55 = por %p53, %p54
    %p57 = scmp.ne.s32.totalorder %s40, %s56
    %p58 = scmp.eq.s32.totalorder %s18, 0
    %p59 = por %p57, %p58
    %s61 = sadd.s32 %s60, 1
    %p64 = scmp.eq.s32.totalorder %s12, 1
    %p65 = scmp.ne.s32.totalorder %s60, %s62
    %p66 = scmp.eq.s32.totalorder %s12, 0
    %p67 = por %p65, %p66
    %p68 = scmp.ne.s32.totalorder %s60, %s62
    %p69 = scmp.eq.s32.totalorder %s17, 1
    %p70 = por %p68, %p69
    %p71 = scmp.ne.s32.totalorder %s62, %s63
    %p72 = scmp.eq.s32.totalorder %s17, 0
    %p73 = por %p71, %p72
    %p74 = scmp.ne.s32.totalorder %s62, %s63
    %p75 = scmp.eq.s32.totalorder %s18, 1
    %p76 = por %p74, %p75
    %p78 = scmp.ne.s32.totalorder %s63, %s77
    %p79 = scmp.eq.s32.totalorder %s18, 0
    %p80 = por %p78, %p79
    %s82 = sadd.s32 %s81, 1
    %p85 = scmp.eq.s32.totalorder %s12, 1
    %p86 = scmp.ne.s32.totalorder %s81, %s83
    %p87 = scmp.eq.s32.totalorder %s12, 0
    %p88 = por %p86, %p87
    %p89 = scmp.ne.s32.totalorder %s81, %s83
    %p90 = scmp.eq.s32.totalorder %s17, 1
    %p91 = por %p89, %p90
    %p92 = scmp.ne.s32.totalorder %s83, %s84
    %p93 = scmp.eq.s32.totalorder %s17, 0
    %p94 = por %p92, %p93
    %p95 = scmp.ne.s32.totalorder %s83, %s84
    %p96 = scmp.eq.s32.totalorder %s18, 1
    %p97 = por %p95, %p96
    %p99 = scmp.ne.s32.totalorder %s84, %s98
    %p100 = scmp.eq.s32.totalorder %s18, 0
    %p101 = por %p99, %p100
    %s102 = ssub.s32 %s19, %s31
    %s103 = ssub.s32 %s20, %s27
    %s104 = sor.u32 %s102, %s103
    %p105 = scmp.eq.s32.totalorder %s104, 0
    %s107 = sadd.s32 %s106, 1
    %s108 = scalar_select %p105, %s106, %s107
    %p111 = pneg %p105
    %p112 = scmp.eq.s32.totalorder %s12, 1
    %p113 = por %p111, %p112
    %p114 = scmp.ne.s32.totalorder %s106, %s109
    %p115 = scmp.eq.s32.totalorder %s12, 0
    %p116 = por %p114, %p115
    %p117 = scmp.ne.s32.totalorder %s106, %s109
    %p118 = scmp.eq.s32.totalorder %s17, 1
    %p119 = por %p117, %p118
    %p120 = scmp.ne.s32.totalorder %s109, %s110
    %p121 = scmp.eq.s32.totalorder %s17, 0
    %p122 = por %p120, %p121
    %p123 = scmp.ne.s32.totalorder %s109, %s110
    %p124 = scmp.eq.s32.totalorder %s18, 1
    %p125 = por %p123, %p124
    %p127 = scmp.ne.s32.totalorder %s110, %s126
    %p128 = scmp.eq.s32.totalorder %s18, 0
    %p129 = por %p127, %p128
    %s130 = ssub.s32 %s19, %s31
    %s131 = ssub.s32 %s20, %s27
    %s132 = sor.u32 %s130, %s131
    %p133 = scmp.eq.s32.totalorder %s132, 0
    %s135 = sadd.s32 %s134, 1
    %s136 = scalar_select %p133, %s134, %s135
    %p139 = pneg %p133
    %p140 = scmp.eq.s32.totalorder %s12, 1
    %p141 = por %p139, %p140
    %p142 = scmp.ne.s32.totalorder %s134, %s137
    %p143 = scmp.eq.s32.totalorder %s12, 0
    %p144 = por %p142, %p143
    %p145 = scmp.ne.s32.totalorder %s134, %s137
    %p146 = scmp.eq.s32.totalorder %s17, 1
    %p147 = por %p145, %p146
    %p148 = scmp.ne.s32.totalorder %s137, %s138
    %p149 = scmp.eq.s32.totalorder %s17, 0
    %p150 = por %p148, %p149
    %p151 = scmp.ne.s32.totalorder %s137, %s138
    %p152 = scmp.eq.s32.totalorder %s18, 1
    %p153 = por %p151, %p152
    %p155 = scmp.ne.s32.totalorder %s138, %s154
    %p156 = scmp.eq.s32.totalorder %s18, 0
    %p157 = por %p155, %p156
    %s158 = ssub.s32 %s19, %s31
    %s159 = ssub.s32 %s20, %s27
    %s160 = sor.u32 %s158, %s159
    %p161 = scmp.eq.s32.totalorder %s160, 0
    %s163 = sadd.s32 %s162, 1
    %s164 = scalar_select %p161, %s162, %s163
    %p167 = pneg %p161
    %p168 = scmp.eq.s32.totalorder %s12, 1
    %p169 = por %p167, %p168
    %p170 = scmp.ne.s32.totalorder %s162, %s165
    %p171 = scmp.eq.s32.totalorder %s12, 0
    %p172 = por %p170, %p171
    %p173 = scmp.ne.s32.totalorder %s162, %s165
    %p174 = scmp.eq.s32.totalorder %s17, 1
    %p175 = por %p173, %p174
    %p176 = scmp.ne.s32.totalorder %s165, %s166
    %p177 = scmp.eq.s32.totalorder %s17, 0
    %p178 = por %p176, %p177
    %p179 = scmp.ne.s32.totalorder %s165, %s166
    %p180 = scmp.eq.s32.totalorder %s18, 1
    %p181 = por %p179, %p180
    %p183 = scmp.ne.s32.totalorder %s166, %s182
    %p184 = scmp.eq.s32.totalorder %s18, 0
    %p185 = por %p183, %p184
    %p186 = scmp.le.s32.totalorder 1, %s12
    %p187 = scmp.lt.s32.totalorder %s12, 3
    %p188 = pnand %p186, %p187
    %p189 = pneg %p188
    // Predicated region
    $region9: #{part_association_fields_forward.1} parent=5 // pred_check
      _
    $region10: #{part_association_fields_forward.1} parent=5 // pred_check_branch
      %191 = sbr.rel (%p188) target = $region12
    $region11: #{part_association_fields_forward.1} parent=5 // pred_region
      %s192 = ssub.s32 %s12, 1
      // Predicated region
      $region13: #{part_association_fields_forward.1} parent=11 // pred_check
        %p193 = pneg %p73
      $region14: #{part_association_fields_forward.1} parent=11 // pred_check_branch
        %195 = sbr.rel (%p193) target = $region16
      $region15: #{part_association_fields_forward.1} parent=11 // pred_region
        _
      $region16: #{part_association_fields_forward.1} parent=11 // pred_fallthru
        _
      // Predicated region
      $region17: #{part_association_fields_forward.1} parent=11 // pred_check
        %p196 = pneg %p94
      $region18: #{part_association_fields_forward.1} parent=11 // pred_check_branch
        %198 = sbr.rel (%p196) target = $region20
      $region19: #{part_association_fields_forward.1} parent=11 // pred_region
        _
      $region20: #{part_association_fields_forward.1} parent=11 // pred_fallthru
        _
    $region12: #{part_association_fields_forward.1} parent=5 // pred_fallthru
      _
    %p199 = scmp.lt.s32.totalorder %s12, 2
    // Predicated region
    $region21: #{part_association_fields_forward.1} parent=5 // pred_check
      %p200 = pneg %p199
    $region22: #{part_association_fields_forward.1} parent=5 // pred_check_branch
      %202 = sbr.rel (%p200) target = $region24
    $region23: #{part_association_fields_forward.1} parent=5 // pred_region
      // Predicated region
      $region25: #{part_association_fields_forward.1} parent=23 // pred_check
        %p203 = pneg %p46
      $region26: #{part_association_fields_forward.1} parent=23 // pred_check_branch
        %205 = sbr.rel (%p203) target = $region28
      $region27: #{part_association_fields_forward.1} parent=23 // pred_region
        %s206 = smul.u32 2, %s20
        %p207 = scmp.lt.s32.totalorder %s19, 1
        %s208 = scalar_select %p207, %s19, 1
        %p209 = scmp.lt.s32.totalorder %s206, 1
        %s210 = scalar_select %p209, %s206, 1
        %s211 = smul.addr %s208, 2
        %s212 = sadd.s32 %s210, %s211
        %s213 = smul.addr %s212, 4
        %s214 = scalar_lea.vmem %s0, %s213
        %s215 = smul.u32 2, %s20
      $region28: #{part_association_fields_forward.1} parent=23 // pred_fallthru
        _
    $region24: #{part_association_fields_forward.1} parent=5 // pred_fallthru
      _
    %p216 = scmp.le.s32.totalorder 1, %s12
    %p217 = scmp.lt.s32.totalorder %s12, 3
    %p218 = pnand %p216, %p217
    %p219 = pneg %p218
    // Predicated region
    $region29: #{part_association_fields_forward.1} parent=5 // pred_check
      _
    $region30: #{part_association_fields_forward.1} parent=5 // pred_check_branch
      %221 = sbr.rel (%p218) target = $region32
    $region31: #{part_association_fields_forward.1} parent=5 // pred_region
      %s222 = ssub.s32 %s12, 1
      %s223 = smul.u32 2, %s22
      %p224 = scmp.lt.s32.totalorder %s21, 1
      %s225 = scalar_select %p224, %s21, 1
      %p226 = scmp.lt.s32.totalorder %s223, 1
      %s227 = scalar_select %p226, %s223, 1
      %s228 = smul.addr %s225, 2
      %s229 = sadd.s32 %s227, %s228
      %s230 = smul.addr %s229, 4
      %s231 = scalar_lea.vmem %s0, %s230
      %p232 = pneg %p52
      %p233 = pneg %p49
      %p234 = pneg %p73
      %p235 = pneg %p70
      %p236 = pneg %p94
      %p237 = pneg %p91
      %p238 = pneg %p122
      %p239 = pneg %p119
      %s240 = smul.u32 2, %s22
      %p241 = scmp.lt.s32.totalorder %s21, 1
      %s242 = scalar_select %p241, %s21, 1
      %p243 = scmp.lt.s32.totalorder %s240, 1
      %s244 = scalar_select %p243, %s240, 1
      %s245 = smul.addr %s242, 2
      %s246 = sadd.s32 %s244, %s245
      %s247 = smul.addr %s246, 4
      %s248 = scalar_lea.vmem %s3, %s247
      %p249 = pneg %p150
      %p250 = pneg %p147
      %s251 = smul.u32 2, %s22
      %p252 = scmp.lt.s32.totalorder %s21, 1
      %s253 = scalar_select %p252, %s21, 1
      %p254 = scmp.lt.s32.totalorder %s251, 1
      %s255 = scalar_select %p254, %s251, 1
      %s256 = smul.addr %s253, 2
      %s257 = sadd.s32 %s255, %s256
      %s258 = smul.addr %s257, 8
      %s259 = scalar_lea.vmem %s4, %s258
      %p260 = pneg %p178
      %p261 = pneg %p175
      %s262 = smul.u32 2, %s22
      %p263 = scmp.lt.s32.totalorder %s21, 1
      %s264 = scalar_select %p263, %s21, 1
      %p265 = scmp.lt.s32.totalorder %s262, 1
      %s266 = scalar_select %p265, %s262, 1
      %s267 = smul.addr %s264, 2
      %s268 = sadd.s32 %s266, %s267
      %s269 = smul.addr %s268, 8
      %s270 = scalar_lea.vmem %s5, %s269
      %s271 = smul.u32 2, %s22
      %p272 = scmp.lt.s32.totalorder %s21, 1
      %s273 = scalar_select %p272, %s21, 1
      %p274 = scmp.lt.s32.totalorder %s271, 1
      %s275 = scalar_select %p274, %s271, 1
      %s276 = smul.addr %s273, 2
      %s277 = sadd.s32 %s275, %s276
      %s278 = smul.addr %s277, 4
      %s279 = scalar_lea.vmem %s0, %s278
      %s280 = smul.u32 2, %s22
      %s281 = smul.u32 2, %s22
      %p282 = scmp.lt.s32.totalorder %s21, 1
      %s283 = scalar_select %p282, %s21, 1
      %p284 = scmp.lt.s32.totalorder %s281, 1
      %s285 = scalar_select %p284, %s281, 1
      %s286 = smul.addr %s283, 2
      %s287 = sadd.s32 %s285, %s286
      %s288 = smul.addr %s287, 4
      %s289 = scalar_lea.vmem %s3, %s288
      %s290 = smul.u32 2, %s22
      %s291 = smul.u32 2, %s22
      %p292 = scmp.lt.s32.totalorder %s21, 1
      %s293 = scalar_select %p292, %s21, 1
      %p294 = scmp.lt.s32.totalorder %s291, 1
      %s295 = scalar_select %p294, %s291, 1
      %s296 = smul.addr %s293, 2
      %s297 = sadd.s32 %s295, %s296
      %s298 = smul.addr %s297, 8
      %s299 = scalar_lea.vmem %s4, %s298
      %s300 = smul.u32 2, %s22
      %s301 = smul.u32 2, %s22
      %p302 = scmp.lt.s32.totalorder %s21, 1
      %s303 = scalar_select %p302, %s21, 1
      %p304 = scmp.lt.s32.totalorder %s301, 1
      %s305 = scalar_select %p304, %s301, 1
      %s306 = smul.addr %s303, 2
      %s307 = sadd.s32 %s305, %s306
      %s308 = smul.addr %s307, 8
      %s309 = scalar_lea.vmem %s5, %s308
      %s310 = smul.u32 2, %s22
      %v311 = vld [vmem:[%s279] sm:$0xff]
      %v312 = vld [vmem:[%s1] sm:$0xff]
      %v313 = vld [vmem:[%s1 + $0x8] sm:$0xff]
      %v314 = vld [vmem:[%s1 + $0x10] sm:$0xf]
      %v315 = vld [vmem:[%s2] sm:$0xff]
      %v316 = vld [vmem:[%s2 + $0x8] sm:$0xff]
      %v317 = vld [vmem:[%s2 + $0x10] sm:$0xf]
      %319 = vset.pattern.permute.xlu0 0
      %320 = vperm.xlu0 %319, %v315
      %v321 = vpop.permute.xlu0 %320
      %324 = vset.pattern.permute.xlu0 0
      %325 = vperm.xlu0 %324, %v316
      %v326 = vpop.permute.xlu0 %325
      %329 = vset.pattern.permute.xlu0 0
      %330 = vperm.xlu0 %329, %v317
      %v331 = vpop.permute.xlu0 %330
      %v334 = vcombine.high %v311, %v311
      %vm335 = vcmask 31744
      %v337 = vsel %vm335, %v312, 0
      %v340 = vsel %vm335, %v313, 0
      %v343 = vsel %vm335, %v314, 0
      %vm345 = vcmask 1043456
      %v346 = vsel %vm345, %v311, 0
      %v348 = vsel %vm345, %v334, 0
      %350 = vmatprep.subr.mxu0 %v348
      %351 = vmatpush1.msra.mxu0 %v346
      %352 = vmatprep.subr.mxu0 0.0
      %353 = vmatpush1.msra.mxu0 0.0
      %354 = vmatprep.subr.mxu0 0.0
      %355 = vmatpush1.msra.mxu0 0.0
      %356 = vmatprep.subr.mxu0 0.0
      %357 = vmatpush1.msra.mxu0 0.0
      %358 = vmatprep.subr.mxu0 0.0
      %359 = vmatpush1.msra.mxu0 0.0
      %360 = vmatprep.subr.mxu0 0.0
      %361 = vmatpush1.msra.mxu0 0.0
      %362 = vmatprep.subr.mxu0 0.0
      %363 = vmatpush1.msra.mxu0 0.0
      %364 = vmatprep.subr.mxu0 0.0
      %365 = vmatpush1.msra.mxu0 0.0
      %366 = vmatprep.subr.mxu0 0.0
      %367 = vmatpush1.msra.mxu0 0.0
      %368 = vmatprep.subr.mxu0 0.0
      %369 = vmatpush1.msra.mxu0 0.0
      %370 = vmatprep.subr.mxu0 0.0
      %371 = vmatpush1.msra.mxu0 0.0
      %372 = vmatprep.subr.mxu0 0.0
      %373 = vmatpush1.msra.mxu0 0.0
      %374 = vmatprep.subr.mxu0 0.0
      %375 = vmatpush1.msra.mxu0 0.0
      %376 = vmatprep.subr.mxu0 0.0
      %377 = vmatpush1.msra.mxu0 0.0
      %378 = vmatprep.subr.mxu0 0.0
      %379 = vmatpush1.msra.mxu0 0.0
      %380 = vmatprep.subr.mxu0 0.0
      %381 = vmatpush1.msra.mxu0 0.0
      %382 = vmatprep.subr.mxu0 0.0
      %383 = vmatpush1.msra.mxu0 0.0
      %384 = vmatprep.subr.mxu0 0.0
      %385 = vmatpush1.msra.mxu0 0.0
      %386 = vmatprep.subr.mxu0 0.0
      %387 = vmatpush1.msra.mxu0 0.0
      %388 = vmatprep.subr.mxu0 0.0
      %389 = vmatpush1.msra.mxu0 0.0
      %390 = vmatprep.subr.mxu0 0.0
      %391 = vmatpush1.msra.mxu0 0.0
      %392 = vmatprep.subr.mxu0 0.0
      %393 = vmatpush1.msra.mxu0 0.0
      %394 = vmatprep.subr.mxu0 0.0
      %395 = vmatpush1.msra.mxu0 0.0
      %396 = vmatprep.subr.mxu0 0.0
      %397 = vmatpush1.msra.mxu0 0.0
      %398 = vmatprep.subr.mxu0 0.0
      %399 = vmatpush1.msra.mxu0 0.0
      %400 = vmatprep.subr.mxu0 0.0
      %401 = vmatpush1.msra.mxu0 0.0
      %402 = vmatprep.subr.mxu0 0.0
      %403 = vmatpush1.msra.mxu0 0.0
      %404 = vmatprep.subr.mxu0 0.0
      %405 = vmatpush1.msra.mxu0 0.0
      %406 = vmatprep.subr.mxu0 0.0
      %407 = vmatpush1.msra.mxu0 0.0
      %408 = vmatprep.subr.mxu0 0.0
      %409 = vmatpush1.msra.mxu0 0.0
      %410 = vmatprep.subr.mxu0 0.0
      %411 = vmatpush1.msra.mxu0 0.0
      %412 = vmatprep.subr.mxu0 0.0
      %413 = vmatpush1.msra.mxu0 0.0
      %414 = vmatprep.mubr.f32.mxu0 0.0
      %415 = vmatmul.mubr.f32.gmra.mrb[0].mxu0 %v337
      %v416 = vpop.f32.mrb[0].mxu0
      %v417 = vadd.f32 %v321, %v416
      %v418 = vpop.f32.mrb[0].mxu0
      %v419 = vadd.f32 %v321, %v418
      %420 = vmatprep.mubr.f32.mxu0 0.0
      %421 = vmatmul.mubr.f32.gmra.mrb[0].mxu0 %v340
      %v422 = vpop.f32.mrb[0].mxu0
      %v423 = vadd.f32 %v326, %v422
      %v424 = vpop.f32.mrb[0].mxu0
      %v425 = vadd.f32 %v326, %v424
      %426 = vmatprep.mubr.f32.mxu0 0.0
      %427 = vmatmul.mubr.f32.gmra.mrb[0].mxu0 %v343
      %v428 = vpop.f32.mrb[0].mxu0
      %v429 = vadd.f32 %v331, %v428
      %v430 = vpop.f32.mrb[0].mxu0
      %v431 = vadd.f32 %v331, %v430
      %432 = vdwg.mxu0
      %433 = vst [vmem:[%s299] sm:$0xff] %v417
      %434 = vst [vmem:[%s299 + $0x8] sm:$0xff] %v419
      %435 = vst [vmem:[%s309] sm:$0xff] %v423
      %436 = vst [vmem:[%s309 + $0x8] sm:$0xff] %v425
      %v437 = vxor.u32 %v429, 2147483648
      %v438 = vxor.u32 %v431, 2147483648
      %v439 = vmul.f32 %v437, 1.442695
      %v440 = vpow.pop %v439
      %v441 = vmul.f32 %v438, 1.442695
      %v442 = vpow.pop %v441
      %v443 = vadd.f32 %v440, 1.0
      %v444 = vadd.f32 %v442, 1.0
      %v445 = vrcp.pop %v443
      %v446 = vmul.f32 1.0, %v445
      %v447 = vrcp.pop %v444
      %v448 = vmul.f32 1.0, %v447
      %v451 = vcombine.low %v446, %v448
      %453 = vst [vmem:[%s289] sm:$0xff] %v451
      %s454 = smul.u32 2, %s22
      %p455 = scmp.lt.s32.totalorder %s21, 1
      %s456 = scalar_select %p455, %s21, 1
      %p457 = scmp.lt.s32.totalorder %s454, 1
      %s458 = scalar_select %p457, %s454, 1
      %s459 = smul.addr %s456, 2
      %s460 = sadd.s32 %s458, %s459
      %s461 = smul.addr %s460, 4
      %s462 = scalar_lea.vmem %s3, %s461
      %s463 = smul.u32 2, %s22
      %p464 = scmp.lt.s32.totalorder %s21, 1
      %s465 = scalar_select %p464, %s21, 1
      %p466 = scmp.lt.s32.totalorder %s463, 1
      %s467 = scalar_select %p466, %s463, 1
      %s468 = smul.addr %s465, 2
      %s469 = sadd.s32 %s467, %s468
      %s470 = smul.addr %s469, 8
      %s471 = scalar_lea.vmem %s4, %s470
      %s472 = smul.u32 2, %s22
      %p473 = scmp.lt.s32.totalorder %s21, 1
      %s474 = scalar_select %p473, %s21, 1
      %p475 = scmp.lt.s32.totalorder %s472, 1
      %s476 = scalar_select %p475, %s472, 1
      %s477 = smul.addr %s474, 2
      %s478 = sadd.s32 %s476, %s477
      %s479 = smul.addr %s478, 8
      %s480 = scalar_lea.vmem %s5, %s479
      // Predicated region
      $region33: #{part_association_fields_forward.1} parent=31 // pred_check
        %p481 = pneg %p119
      $region34: #{part_association_fields_forward.1} parent=31 // pred_check_branch
        %483 = sbr.rel (%p481) target = $region36
      $region35: #{part_association_fields_forward.1} parent=31 // pred_region
        %s484 = smul.u32 2, %s22
      $region36: #{part_association_fields_forward.1} parent=31 // pred_fallthru
        _
      // Predicated region
      $region37: #{part_association_fields_forward.1} parent=31 // pred_check
        %p485 = pneg %p147
      $region38: #{part_association_fields_forward.1} parent=31 // pred_check_branch
        %487 = sbr.rel (%p485) target = $region40
      $region39: #{part_association_fields_forward.1} parent=31 // pred_region
        %s488 = smul.u32 2, %s22
      $region40: #{part_association_fields_forward.1} parent=31 // pred_fallthru
        _
      // Predicated region
      $region41: #{part_association_fields_forward.1} parent=31 // pred_check
        %p489 = pneg %p175
      $region42: #{part_association_fields_forward.1} parent=31 // pred_check_branch
        %491 = sbr.rel (%p489) target = $region44
      $region43: #{part_association_fields_forward.1} parent=31 // pred_region
        %s492 = smul.u32 2, %s22
      $region44: #{part_association_fields_forward.1} parent=31 // pred_fallthru
        _
    $region32: #{part_association_fields_forward.1} parent=5 // pred_fallthru
      _
    %p493 = scmp.le.s32.totalorder 2, %s12
    // Predicated region
    $region45: #{part_association_fields_forward.1} parent=5 // pred_check
      %p494 = pneg %p493
    $region46: #{part_association_fields_forward.1} parent=5 // pred_check_branch
      %496 = sbr.rel (%p494) target = $region48
    $region47: #{part_association_fields_forward.1} parent=5 // pred_region
      %s497 = ssub.s32 %s12, 2
      // Predicated region
      $region49: #{part_association_fields_forward.1} parent=47 // pred_check
        %p498 = pneg %p125
      $region50: #{part_association_fields_forward.1} parent=47 // pred_check_branch
        %500 = sbr.rel (%p498) target = $region52
      $region51: #{part_association_fields_forward.1} parent=47 // pred_region
        %s501 = smul.u32 2, %s24
        %p502 = scmp.lt.s32.totalorder %s23, 1
        %s503 = scalar_select %p502, %s23, 1
        %p504 = scmp.lt.s32.totalorder %s501, 1
        %s505 = scalar_select %p504, %s501, 1
        %s506 = smul.addr %s503, 2
        %s507 = sadd.s32 %s505, %s506
        %s508 = smul.addr %s507, 4
        %s509 = scalar_lea.vmem %s3, %s508
      $region52: #{part_association_fields_forward.1} parent=47 // pred_fallthru
        _
      // Predicated region
      $region53: #{part_association_fields_forward.1} parent=47 // pred_check
        %p510 = pneg %p153
      $region54: #{part_association_fields_forward.1} parent=47 // pred_check_branch
        %512 = sbr.rel (%p510) target = $region56
      $region55: #{part_association_fields_forward.1} parent=47 // pred_region
        %s513 = smul.u32 2, %s24
        %p514 = scmp.lt.s32.totalorder %s23, 1
        %s515 = scalar_select %p514, %s23, 1
        %p516 = scmp.lt.s32.totalorder %s513, 1
        %s517 = scalar_select %p516, %s513, 1
        %s518 = smul.addr %s515, 2
        %s519 = sadd.s32 %s517, %s518
        %s520 = smul.addr %s519, 8
        %s521 = scalar_lea.vmem %s4, %s520
      $region56: #{part_association_fields_forward.1} parent=47 // pred_fallthru
        _
      // Predicated region
      $region57: #{part_association_fields_forward.1} parent=47 // pred_check
        %p522 = pneg %p181
      $region58: #{part_association_fields_forward.1} parent=47 // pred_check_branch
        %524 = sbr.rel (%p522) target = $region60
      $region59: #{part_association_fields_forward.1} parent=47 // pred_region
        %s525 = smul.u32 2, %s24
        %p526 = scmp.lt.s32.totalorder %s23, 1
        %s527 = scalar_select %p526, %s23, 1
        %p528 = scmp.lt.s32.totalorder %s525, 1
        %s529 = scalar_select %p528, %s525, 1
        %s530 = smul.addr %s527, 2
        %s531 = sadd.s32 %s529, %s530
        %s532 = smul.addr %s531, 8
        %s533 = scalar_lea.vmem %s5, %s532
      $region60: #{part_association_fields_forward.1} parent=47 // pred_fallthru
        _
    $region48: #{part_association_fields_forward.1} parent=5 // pred_fallthru
      _
  $region6: #{part_association_fields_forward.1} parent=0 // loop_footer
    %s16 = sadd.s32 1, %s12
  $region7: #{part_association_fields_forward.1} parent=0 // loop_footer_branch
    %11 = sbr.rel target = $region3
  $region8: #{part_association_fields_forward.1} parent=0 // loop_exit
    _

</llo_original>
